<compile_context>
chip_gen: v6e
topology: v6e:2x2x1
jax: 0.10.0
libtpu: 0.0.40
codegen_flags: <defaults>
</compile_context>

<pallas_src>
import functools

import jax
import jax.numpy as jnp
from jax import lax
from jax.experimental import pallas as pl
from jax.experimental.pallas import tpu as pltpu


def _gemm_relu_kernel(p_ref, w_ref, o_ref):
    # p_ref: (1, K, HW)    im2col patches for one batch element (K = C_in*KH*KW)
    # w_ref: (C_out, K)    reshaped conv weight (shared across grid steps)
    # o_ref: (1, C_out, HW) lane-dense output (HW on the lane axis)
    patches = p_ref[0]                      # (K, HW)
    w = w_ref[...]                          # (C_out, K)
    # Single MXU contraction over K; accumulator lives in registers / MXU
    # result buffer, never round-trips through a VMEM scratch.
    acc = jnp.dot(w, patches, preferred_element_type=jnp.float32)   # (C_out, HW) f32
    # Fused ReLU (torch inplace ReLU has identical forward semantics).
    o_ref[0] = jnp.maximum(acc, 0.0).astype(o_ref.dtype)


def basic_conv2d(x_nchw, w_oihw, *, padding=1, stride=1):
    """Forward of BasicConv2d. x_nchw: (N, C_in, H, W), w_oihw: (C_out, C_in, KH, KW)."""
    N, C_in, H, W = x_nchw.shape
    C_out, C_in_w, KH, KW = w_oihw.shape
    assert C_in == C_in_w

    H_out = (H + 2 * padding - KH) // stride + 1
    W_out = (W + 2 * padding - KW) // stride + 1
    HW = H_out * W_out
    K = C_in * KH * KW

    # ---- plain-JAX glue: spatial pad + im2col patch extraction (NCHW order) ----
    x_pad = jnp.pad(x_nchw, ((0, 0), (0, 0), (padding, padding), (padding, padding)))
    # patches[n, ci*(KH*KW) + kh*KW + kw, h*W_out + w] = x_pad[n, ci, h*s + kh, w*s + kw]
    patches = jnp.stack(
        [
            x_pad[:, :,
                  kh:kh + stride * (H_out - 1) + 1:stride,
                  kw:kw + stride * (W_out - 1) + 1:stride]
            for kh in range(KH) for kw in range(KW)
        ],
        axis=2,
    ).reshape(N, K, HW)
    # OIHW -> (C_out, C_in*KH*KW); K ordering (ci, kh, kw) matches the patches above.
    w2d = w_oihw.reshape(C_out, K)

    out = pl.pallas_call(
        _gemm_relu_kernel,
        out_shape=jax.ShapeDtypeStruct((N, C_out, HW), x_nchw.dtype),
        grid_spec=pltpu.PrefetchScalarGridSpec(
            num_scalar_prefetch=0,
            grid=(N,),
            in_specs=[
                pl.BlockSpec((1, K, HW), lambda n: (n, 0, 0)),
                pl.BlockSpec((C_out, K), lambda n: (0, 0)),
            ],
            out_specs=pl.BlockSpec((1, C_out, HW), lambda n: (n, 0, 0)),
        ),
        compiler_params=pltpu.CompilerParams(
            dimension_semantics=("parallel",),
        ),
    )(patches, w2d)

    # Free reshape back to PyTorch's NCHW convention (already in NCHW order).
    return out.reshape(N, C_out, H_out, W_out)


if __name__ == "__main__":
    # Shapes consistent with BasicConv2d(in_channels=4, out_channels=8,
    # kernel_size=3, padding=1) applied to x of shape (2, 4, 16, 16).
    N, C_in, H, W = 2, 4, 16, 16
    C_out, KH, KW = 8, 3, 3

    key = jax.random.PRNGKey(0)
    kx, kw = jax.random.split(key)
    x = jax.random.normal(kx, (N, C_in, H, W), dtype=jnp.float32)
    w = jax.random.normal(kw, (C_out, C_in, KH, KW), dtype=jnp.float32) * 0.1

    out = basic_conv2d(x, w, padding=1)
    out = jax.block_until_ready(out)

    # Reference check against XLA conv + relu (same semantics as torch).
    ref = lax.conv_general_dilated(
        x, w, window_strides=(1, 1), padding=((1, 1), (1, 1)),
        dimension_numbers=("NCHW", "OIHW", "NCHW"),
    )
    ref = jnp.maximum(ref, 0.0)
    assert out.shape == (N, C_out, H, W)
    assert jnp.allclose(out, ref, atol=1e-4, rtol=1e-4)

    print("KERNEL_OK")
</pallas_src>

<mosaic_0001>
module attributes {stable_mosaic.version = 11 : i64} {
  func.func @_gemm_relu_kernel(%arg0: i32, %arg1: memref<1x36x256xf32, #tpu.memory_space<vmem>>, %arg2: memref<8x36xf32, #tpu.memory_space<vmem>>, %arg3: memref<1x8x256xf32, #tpu.memory_space<vmem>>) attributes {dimension_semantics = [#tpu.dimension_semantics<parallel>], iteration_bounds = array<i64: 2>, scalar_prefetch = 0 : i64, scratch_operands = 0 : i64, tpu.core_type = #tpu.core_type<tc>, window_params = [{transform_indices = @transform_0, window_bounds = array<i64: 1, 36, 256>}, {pipeline_mode = #tpu.pipeline_mode<synchronous>, transform_indices = @transform_1, window_bounds = array<i64: 8, 36>}, {transform_indices = @transform_2, window_bounds = array<i64: 1, 8, 256>}]} {
    %c0 = arith.constant 0 : index
    %c0_0 = arith.constant 0 : index
    %c0_1 = arith.constant 0 : index
    %0 = vector.load %arg1[%c0, %c0_0, %c0_1] : memref<1x36x256xf32, #tpu.memory_space<vmem>>, vector<1x36x256xf32>
    %1 = vector.shape_cast %0 : vector<1x36x256xf32> to vector<36x256xf32>
    %c0_2 = arith.constant 0 : index
    %c0_3 = arith.constant 0 : index
    %2 = vector.load %arg2[%c0_2, %c0_3] : memref<8x36xf32, #tpu.memory_space<vmem>>, vector<8x36xf32>
    %cst = arith.constant dense<0.000000e+00> : vector<8x256xf32>
    %3 = tpu.matmul %2, %1, %cst {dimension_numbers = #tpu.dot_dimension_numbers<[1], [0], [0], [1], [0, 0, 1, 1], [], []>} : vector<8x36xf32>, vector<36x256xf32>, vector<8x256xf32> -> vector<8x256xf32>
    %cst_4 = arith.constant 0.000000e+00 : f32
    %4 = vector.broadcast %cst_4 : f32 to vector<8x256xf32>
    %5 = arith.maximumf %3, %4 : vector<8x256xf32>
    %c0_5 = arith.constant 0 : index
    %c0_6 = arith.constant 0 : index
    %c0_7 = arith.constant 0 : index
    %6 = vector.load %arg3[%c0_5, %c0_6, %c0_7] : memref<1x8x256xf32, #tpu.memory_space<vmem>>, vector<1x8x256xf32>
    %7 = vector.shape_cast %6 : vector<1x8x256xf32> to vector<8x256xf32>
    %8 = vector.shape_cast %5 : vector<8x256xf32> to vector<1x8x256xf32>
    tpu.vector_store %arg3[%c0_5, %c0_6, %c0_7], %8 {strides = array<i32>} : memref<1x8x256xf32, #tpu.memory_space<vmem>>, vector<1x8x256xf32>,
    return
  }
  func.func @transform_0(%arg0: i32) -> (i32, i32, i32) {
    %c0_i32 = arith.constant 0 : i32
    %c0_i32_0 = arith.constant 0 : i32
    %c0_i32_1 = arith.constant 0 : i32
    return %arg0, %c0_i32, %c0_i32_0 : i32, i32, i32
  }
  func.func @transform_1(%arg0: i32) -> (i32, i32) {
    %c0_i32 = arith.constant 0 : i32
    %c0_i32_0 = arith.constant 0 : i32
    %c0_i32_1 = arith.constant 0 : i32
    return %c0_i32, %c0_i32_0 : i32, i32
  }
  func.func @transform_2(%arg0: i32) -> (i32, i32, i32) {
    %c0_i32 = arith.constant 0 : i32
    %c0_i32_0 = arith.constant 0 : i32
    %c0_i32_1 = arith.constant 0 : i32
    return %arg0, %c0_i32, %c0_i32_0 : i32, i32, i32
  }
}

</mosaic_0001>

<llo_original>
// kernel: tpu_custom_call.1
$region0: #{tpu_custom_call.1}
  #allocation0 [shape = 'u32[]', space=smem, size = 0x4, offset = 0x4, fixed_abs, tag = 'smem constant byte address 0x4 - core index']
  #allocation1 [shape = 'u32[144,128]{1,0:T(1,128)}', space=vmem, size = 0x12000, scoped, tag = 'internal scratch']
  %s0 = inlined_call_operand.vmem [shape: f32[2,36,256], index: 0, kind: input, shape index: {}]
  %s1 = inlined_call_operand.vmem [shape: f32[8,36], index: 1, kind: input, shape index: {}]
  %s2 = inlined_call_operand.hbm [shape: f32[2,8,256], index: 2, kind: output, shape index: {}]
  %s3 = sld [smem:[#allocation0]]
  $region41: #{tpu_custom_call.1} parent=0
    _
  %s5 = ssub.s32 1, %s3
  %s6 = scalar_select 0, %s5, %s3
  $region1: #{tpu_custom_call.1} parent=0
    #allocation2 [shape = 'u8[16384]{0}', space=vmem, size = 0x4000, scoped, tag = 'output window, operand 0']
    #allocation3 [shape = 's32[2]{0}', space=sflag, size = 0x8, scoped, tag = 'scoped memory for tpu_custom_call.1']
    %7 = vsyncpa [#allocation3], 0
    %s8 = scalar_lea.sflag [#allocation3], 1
    %9 = vsyncpa %s8, 0
    loop: start=0, step=1, limit=4
    $region2: #{tpu_custom_call.1} parent=1 // loop_pre_header
      _
    $region3: #{tpu_custom_call.1} parent=1 // loop_header
      %s11 = sphi 0, %s15
      %p12 = scmp.ge.s32.totalorder %s11, 4
      %s21 = sphi 0, %s23
      %s24 = sphi 0, %s21
      %s25 = sphi 0, %s24
      %s41 = sphi 0, %s25
      %s45 = sphi 0, %s45
      %s47 = sphi 0, %s45
      %s48 = sphi 0, %s47
      %s62 = sphi 0, %s48
      %s68 = sphi 0, %s70
      %s71 = sphi 0, %s68
      %s72 = sphi 0, %s71
      %s88 = sphi 0, %s72
    $region4: #{tpu_custom_call.1} parent=1 // loop_header_branch
      %14 = sbr.rel (%p12) target = $region8
    $region5: #{tpu_custom_call.1} parent=1 // loop_body
      %s16 = ssub.s32 %s11, 1
      %s17 = ssub.s32 %s11, 2
      %s18 = sadd.s32 %s11, 1
      %s19 = ssub.s32 %s11, %s18
      %p20 = scmp.eq.s32.totalorder %s19, 0
      %s22 = sadd.s32 %s21, 1
      %s23 = scalar_select %p20, %s21, %s22
      %p26 = pneg %p20
      %p27 = scmp.eq.s32.totalorder %s11, 1
      %p28 = por %p26, %p27
      %p29 = scmp.ne.s32.totalorder %s21, %s24
      %p30 = scmp.eq.s32.totalorder %s11, 0
      %p31 = por %p29, %p30
      %p32 = scmp.ne.s32.totalorder %s21, %s24
      %p33 = scmp.eq.s32.totalorder %s16, 1
      %p34 = por %p32, %p33
      %p35 = scmp.ne.s32.totalorder %s24, %s25
      %p36 = scmp.eq.s32.totalorder %s16, 0
      %p37 = por %p35, %p36
      %p38 = scmp.ne.s32.totalorder %s24, %s25
      %p39 = scmp.eq.s32.totalorder %s17, 1
      %p40 = por %p38, %p39
      %p42 = scmp.ne.s32.totalorder %s25, %s41
      %p43 = scmp.eq.s32.totalorder %s17, 0
      %p44 = por %p42, %p43
      %s46 = sadd.s32 %s45, 1
      %p49 = scmp.eq.s32.totalorder %s11, 1
      %p50 = scmp.ne.s32.totalorder %s45, %s47
      %p51 = scmp.eq.s32.totalorder %s11, 0
      %p52 = por %p50, %p51
      %p53 = scmp.ne.s32.totalorder %s45, %s47
      %p54 = scmp.eq.s32.totalorder %s16, 1
      %p55 = por %p53, %p54
      %p56 = scmp.ne.s32.totalorder %s47, %s48
      %p57 = scmp.eq.s32.totalorder %s16, 0
      %p58 = por %p56, %p57
      %p59 = scmp.ne.s32.totalorder %s47, %s48
      %p60 = scmp.eq.s32.totalorder %s17, 1
      %p61 = por %p59, %p60
      %p63 = scmp.ne.s32.totalorder %s48, %s62
      %p64 = scmp.eq.s32.totalorder %s17, 0
      %p65 = por %p63, %p64
      %s66 = ssub.s32 %s11, %s18
      %p67 = scmp.eq.s32.totalorder %s66, 0
      %s69 = sadd.s32 %s68, 1
      %s70 = scalar_select %p67, %s68, %s69
      %p73 = pneg %p67
      %p74 = scmp.eq.s32.totalorder %s11, 1
      %p75 = por %p73, %p74
      %p76 = scmp.ne.s32.totalorder %s68, %s71
      %p77 = scmp.eq.s32.totalorder %s11, 0
      %p78 = por %p76, %p77
      %p79 = scmp.ne.s32.totalorder %s68, %s71
      %p80 = scmp.eq.s32.totalorder %s16, 1
      %p81 = por %p79, %p80
      %p82 = scmp.ne.s32.totalorder %s71, %s72
      %p83 = scmp.eq.s32.totalorder %s16, 0
      %p84 = por %p82, %p83
      %p85 = scmp.ne.s32.totalorder %s71, %s72
      %p86 = scmp.eq.s32.totalorder %s17, 1
      %p87 = por %p85, %p86
      %p89 = scmp.ne.s32.totalorder %s72, %s88
      %p90 = scmp.eq.s32.totalorder %s17, 0
      %p91 = por %p89, %p90
      %p92 = scmp.le.s32.totalorder 1, %s11
      %p93 = scmp.lt.s32.totalorder %s11, 3
      %p94 = pnand %p92, %p93
      %p95 = pneg %p94
      // Predicated region
      $region9: #{tpu_custom_call.1} parent=5 // pred_check
        _
      $region10: #{tpu_custom_call.1} parent=5 // pred_check_branch
        %97 = sbr.rel (%p94) target = $region12
      $region11: #{tpu_custom_call.1} parent=5 // pred_region
        %s98 = ssub.s32 %s11, 1
        // Predicated region
        $region13: #{tpu_custom_call.1} parent=11 // pred_check
          %p99 = pneg %p58
        $region14: #{tpu_custom_call.1} parent=11 // pred_check_branch
          %101 = sbr.rel (%p99) target = $region16
        $region15: #{tpu_custom_call.1} parent=11 // pred_region
          _
        $region16: #{tpu_custom_call.1} parent=11 // pred_fallthru
          _
      $region12: #{tpu_custom_call.1} parent=5 // pred_fallthru
        _
      %p102 = scmp.lt.s32.totalorder %s11, 2
      // Predicated region
      $region17: #{tpu_custom_call.1} parent=5 // pred_check
        %p103 = pneg %p102
      $region18: #{tpu_custom_call.1} parent=5 // pred_check_branch
        %105 = sbr.rel (%p103) target = $region20
      $region19: #{tpu_custom_call.1} parent=5 // pred_region
        // Predicated region
        $region21: #{tpu_custom_call.1} parent=19 // pred_check
          %p106 = pneg %p31
        $region22: #{tpu_custom_call.1} parent=19 // pred_check_branch
          %108 = sbr.rel (%p106) target = $region24
        $region23: #{tpu_custom_call.1} parent=19 // pred_region
          %p109 = scmp.lt.s32.totalorder %s11, 1
          %s110 = scalar_select %p109, %s11, 1
          %s111 = smul.addr %s110, 10
          %s112 = smul.addr %s111, 8
          %s113 = scalar_lea.vmem %s0, %s112
        $region24: #{tpu_custom_call.1} parent=19 // pred_fallthru
          _
      $region20: #{tpu_custom_call.1} parent=5 // pred_fallthru
        _
      %p114 = scmp.le.s32.totalorder 1, %s11
      %p115 = scmp.lt.s32.totalorder %s11, 3
      %p116 = pnand %p114, %p115
      %p117 = pneg %p116
      // Predicated region
      $region25: #{tpu_custom_call.1} parent=5 // pred_check
        _
      $region26: #{tpu_custom_call.1} parent=5 // pred_check_branch
        %119 = sbr.rel (%p116) target = $region28
      $region27: #{tpu_custom_call.1} parent=5 // pred_region
        %s120 = ssub.s32 %s11, 1
        %p121 = scmp.lt.s32.totalorder %s16, 1
        %s122 = scalar_select %p121, %s16, 1
        %s123 = smul.addr %s122, 10
        %s124 = smul.addr %s123, 8
        %s125 = scalar_lea.vmem %s0, %s124
        %p126 = pneg %p37
        %p127 = pneg %p34
        %p128 = pneg %p58
        %p129 = pneg %p55
        %p130 = pneg %p84
        %p131 = pneg %p81
        %s132 = sand.u32 %s71, 1
        %s133 = scalar_lea.sflag [#allocation3], %s132
        %s134 = sand.u32 %s71, 1
        %s135 = smul.addr %s134, 16
        %s136 = scalar_lea.vmem [#allocation2], %s135
        %p137 = scmp.lt.s32.totalorder %s16, 1
        %s138 = scalar_select %p137, %s16, 1
        %s139 = smul.addr %s138, 10
        %s140 = smul.addr %s139, 8
        %s141 = scalar_lea.vmem %s0, %s140
        %v142 = vld [vmem:[%s141] sm:$0xff]
        %v143 = vld [vmem:[%s141 + $0x8] sm:$0xff]
        %v144 = vld [vmem:[%s141 + $0x10] sm:$0xff]
        %v145 = vld [vmem:[%s141 + $0x18] sm:$0xff]
        %v146 = vld [vmem:[%s141 + $0x20] sm:$0xff]
        %v147 = vld [vmem:[%s141 + $0x28] sm:$0xff]
        %v148 = vld [vmem:[%s141 + $0x30] sm:$0xff]
        %v149 = vld [vmem:[%s141 + $0x38] sm:$0xff]
        %v150 = vld [vmem:[%s141 + $0x40] sm:$0xf]
        %v151 = vld [vmem:[%s141 + $0x48] sm:$0xf]
        %v152 = vld [vmem:[%s1] sm:$0xff]
        %vm153 = vcmask 293888
        %v155 = vsel %vm153, %v152, 0
        %vm157 = vcmask 1043456
        %v159 = vsel %vm157, %v150, 0
        %v162 = vsel %vm157, %v151, 0
        %164 = vmatprep.subr.mxu0 0.0
        %165 = vmatpush1.msra.mxu0 0.0
        %166 = vmatprep.subr.mxu0 0.0
        %167 = vmatpush1.msra.mxu0 0.0
        %168 = vmatprep.subr.mxu0 0.0
        %169 = vmatpush1.msra.mxu0 0.0
        %170 = vmatprep.subr.mxu0 0.0
        %171 = vmatpush1.msra.mxu0 0.0
        %172 = vmatprep.subr.mxu0 0.0
        %173 = vmatpush1.msra.mxu0 0.0
        %174 = vmatprep.subr.mxu0 0.0
        %175 = vmatpush1.msra.mxu0 0.0
        %176 = vmatprep.subr.mxu0 0.0
        %177 = vmatpush1.msra.mxu0 0.0
        %178 = vmatprep.subr.mxu0 0.0
        %179 = vmatpush1.msra.mxu0 0.0
        %180 = vmatprep.subr.mxu0 0.0
        %181 = vmatpush1.msra.mxu0 0.0
        %182 = vmatprep.subr.mxu0 0.0
        %183 = vmatpush1.msra.mxu0 0.0
        %184 = vmatprep.subr.mxu0 0.0
        %185 = vmatpush1.msra.mxu0 0.0
        %186 = vmatprep.subr.mxu0 %v162
        %187 = vmatpush1.msra.mxu0 %v159
        %188 = vmatprep.subr.mxu0 %v149
        %189 = vmatpush1.msra.mxu0 %v148
        %190 = vmatprep.subr.mxu0 %v147
        %191 = vmatpush1.msra.mxu0 %v146
        %192 = vmatprep.subr.mxu0 %v145
        %193 = vmatpush1.msra.mxu0 %v144
        %194 = vmatprep.subr.mxu0 %v143
        %195 = vmatpush1.msra.mxu0 %v142
        %196 = vmatprep.subr.mxu0 0.0
        %197 = vmatpush2.msra.mxu0 0.0
        %198 = vmatprep.subr.mxu0 0.0
        %199 = vmatpush2.msra.mxu0 0.0
        %200 = vmatprep.subr.mxu0 0.0
        %201 = vmatpush2.msra.mxu0 0.0
        %202 = vmatprep.subr.mxu0 0.0
        %203 = vmatpush2.msra.mxu0 0.0
        %204 = vmatprep.subr.mxu0 0.0
        %205 = vmatpush2.msra.mxu0 0.0
        %206 = vmatprep.subr.mxu0 0.0
        %207 = vmatpush2.msra.mxu0 0.0
        %208 = vmatprep.subr.mxu0 0.0
        %209 = vmatpush2.msra.mxu0 0.0
        %210 = vmatprep.subr.mxu0 0.0
        %211 = vmatpush2.msra.mxu0 0.0
        %212 = vmatprep.subr.mxu0 0.0
        %213 = vmatpush2.msra.mxu0 0.0
        %214 = vmatprep.subr.mxu0 0.0
        %215 = vmatpush2.msra.mxu0 0.0
        %216 = vmatprep.subr.mxu0 0.0
        %217 = vmatpush2.msra.mxu0 0.0
        %218 = vmatprep.subr.mxu0 0.0
        %219 = vmatpush2.msra.mxu0 0.0
        %220 = vmatprep.subr.mxu0 0.0
        %221 = vmatpush2.msra.mxu0 0.0
        %222 = vmatprep.subr.mxu0 0.0
        %223 = vmatpush2.msra.mxu0 0.0
        %224 = vmatprep.subr.mxu0 0.0
        %225 = vmatpush2.msra.mxu0 0.0
        %226 = vmatprep.subr.mxu0 0.0
        %227 = vmatpush2.msra.mxu0 0.0
        %228 = vmatprep.mubr.f32.mxu0 0.0
        %229 = vmatmul.mubr.f32.gmra.mxu0 %v155
        %v230 = vpop.f32.mrf.mxu0
        %v231 = vadd.f32 0.0, %v230
        %v232 = vpop.f32.mrf.mxu0
        %v233 = vadd.f32 0.0, %v232
        %234 = vdwg.mxu0
        %v235 = vmax.f32 %v231, 0.0
        %v236 = vmax.f32 %v233, 0.0
        %237 = vst [vmem:[%s136] sm:$0xff] %v235
        %238 = vst [vmem:[%s136 + $0x8] sm:$0xff] %v236
        %s239 = sand.u32 %s71, 1
        %s240 = scalar_lea.sflag [#allocation3], %s239
        %s241 = sand.u32 %s71, 1
        %s242 = smul.addr %s241, 16
        %s243 = scalar_lea.vmem [#allocation2], %s242
        // Predicated region
        $region29: #{tpu_custom_call.1} parent=27 // pred_check
          %p244 = pneg %p81
        $region30: #{tpu_custom_call.1} parent=27 // pred_check_branch
          %246 = sbr.rel (%p244) target = $region32
        $region31: #{tpu_custom_call.1} parent=27 // pred_region
          %s248 = ssub.s32 256, 256
          %249 = vsyncadd %s240, %s248
          %s250 = smul.addr %s16, 2
          %s251 = smul.addr %s250, 128
          %s252 = scalar_lea.hbm %s2, %s251
          %s254 = sshll.u32 %s243, 4
          %s255 = int_to_ptr.vmem [resolvable:$true] %s254
          %257 = dma.vmem_to_hbm [thread:$0]  %s255, 256, %s252, %s240
        $region32: #{tpu_custom_call.1} parent=27 // pred_fallthru
          _
      $region28: #{tpu_custom_call.1} parent=5 // pred_fallthru
        _
      %p258 = scmp.le.s32.totalorder 2, %s11
      // Predicated region
      $region33: #{tpu_custom_call.1} parent=5 // pred_check
        %p259 = pneg %p258
      $region34: #{tpu_custom_call.1} parent=5 // pred_check_branch
        %261 = sbr.rel (%p259) target = $region36
      $region35: #{tpu_custom_call.1} parent=5 // pred_region
        %s262 = ssub.s32 %s11, 2
        // Predicated region
        $region37: #{tpu_custom_call.1} parent=35 // pred_check
          %p263 = pneg %p87
        $region38: #{tpu_custom_call.1} parent=35 // pred_check_branch
          %265 = sbr.rel (%p263) target = $region40
        $region39: #{tpu_custom_call.1} parent=35 // pred_region
          %s266 = sand.u32 %s72, 1
          %s267 = scalar_lea.sflag [#allocation3], %s266
          %s268 = sand.u32 %s72, 1
          %s269 = smul.addr %s268, 16
          %s270 = scalar_lea.vmem [#allocation2], %s269
          %271 = dma.done %s267, 256
        $region40: #{tpu_custom_call.1} parent=35 // pred_fallthru
          _
      $region36: #{tpu_custom_call.1} parent=5 // pred_fallthru
        _
    $region6: #{tpu_custom_call.1} parent=1 // loop_footer
      %s15 = sadd.s32 1, %s11
    $region7: #{tpu_custom_call.1} parent=1 // loop_footer_branch
      %10 = sbr.rel target = $region3
    $region8: #{tpu_custom_call.1} parent=1 // loop_exit
      _
    %272 = vsyncpa [#allocation3], 1
    %s273 = scalar_lea.sflag [#allocation3], 1
    %274 = vsyncpa %s273, 1

</llo_original>
